<compile_context>
chip_gen: v7x
topology: tpu7x:2x2x1
jax: 0.10.0
libtpu: 0.0.40
codegen_flags: <defaults>
</compile_context>

<pallas_src>
import functools

import jax
import jax.numpy as jnp
from jax import lax
from jax.experimental import pallas as pl
from jax.experimental.pallas import tpu as pltpu

EPS = 1e-12               # matches LayerNorm(variance_epsilon=1e-12)
_ONEHOT_MAX_VOCAB = 1024  # one-hot MXU gather only for small vocabularies


def _round_up(x, m):
    return (x + m - 1) // m * m


def _vmem_capacity_bytes():
    """Per-core VMEM capacity (generation aware), with a conservative fallback."""
    try:
        cap = int(pltpu.get_tpu_info().vmem_capacity_bytes)
        if cap > 0:
            return cap
    except Exception:
        pass
    return 64 * 1024 * 1024  # conservative: v7x per-TensorCore VMEM


def _layer_norm_f32(x, gamma_row, beta_row):
    """LayerNorm over the last dim, f32 math, rsqrt on the EUP slot."""
    u = jnp.mean(x, axis=-1, keepdims=True)
    xc = x - u
    s = jnp.mean(xc * xc, axis=-1, keepdims=True)
    y = xc * lax.rsqrt(s + EPS)
    return gamma_row * y + beta_row


# ---------------------------------------------------------------------------
# Path A: small vocab -> table resident in VMEM, batched token tiles,
#         in-kernel gather via a one-hot MXU matmul.
# ---------------------------------------------------------------------------
def _emb_ln_resident_kernel(ids_ref, table_ref, gamma_ref, beta_ref, o_ref, *, vocab):
    # ids_ref   : (TM, 1) int32 token ids for this tile
    # table_ref : (V, D)  full embedding table (resident across the grid)
    # gamma_ref, beta_ref : (1, D) f32 LayerNorm affine params
    # o_ref     : (TM, D) output tile
    ids = ids_ref[...]                                   # (TM, 1)
    tm = ids.shape[0]
    tbl = table_ref[...].astype(jnp.float32)             # (V, D)

    # Gather TM rows via a one-hot matmul on the MXU (no per-token row DMAs).
    # NOTE: default f32 matmul precision is accurate well below the 1e-5
    # tolerance used here; a NaN/Inf anywhere in the table would however
    # poison every row (0*inf = nan), unlike a true gather.
    vocab_iota = lax.broadcasted_iota(jnp.int32, (tm, vocab), 1)
    onehot = (vocab_iota == ids).astype(jnp.float32)     # (TM, V)
    x = jnp.dot(onehot, tbl, preferred_element_type=jnp.float32)  # (TM, D)

    o_ref[...] = _layer_norm_f32(x, gamma_ref[...], beta_ref[...]).astype(o_ref.dtype)
    # TODO(synk): nn.Dropout(0.1) is identity at inference; training-mode
    # stochastic masking (pltpu.prng_*) is not implemented here.


def _embeddings_resident(ids_flat, table, gamma, beta, *, vmem_cap,
                         tokens_per_tile=2048):
    n = ids_flat.shape[0]
    v, d = table.shape
    itemsize = jnp.dtype(table.dtype).itemsize
    d_pad = _round_up(d, 128)
    v_pad = _round_up(v, 128)

    # ---- token tile size ----------------------------------------------------
    # Big tiles amortize the ~0.35 us/grid-step overhead and give dense (TM, D)
    # output stores.  Cap TM by a VMEM budget (one-hot intermediate + f32 temps
    # + double-buffered output + padded ids column) derived from the device
    # capacity, and keep >= 2 grid steps when N >= 16 so the "parallel" axis can
    # split across v7x's two TensorCores.
    per_tok = v_pad * 4 + 5 * d_pad * 4 + 2 * 128 * 4
    tm_cap = max(8, ((vmem_cap // 4) // max(per_tok, 1)) // 8 * 8)
    tm = min(tokens_per_tile, tm_cap)
    if n >= 16:
        tm = min(tm, _round_up((n + 1) // 2, 8))   # at least 2 tiles
    else:
        tm = min(tm, _round_up(max(n, 1), 8))
    tm = max(tm, 8)

    # Pad ids only to a multiple of 8 (cheap jnp.pad over N int32s); partial
    # last tiles are masked by Pallas, so no (N, D)-sized slice is needed when
    # N % 8 == 0.
    n_pad = _round_up(n, 8)
    num_tiles = pl.cdiv(n_pad, tm)

    ids_col = jnp.pad(ids_flat, (0, n_pad - n)).reshape(n_pad, 1)
    gamma2 = gamma.reshape(1, d).astype(jnp.float32)
    beta2 = beta.reshape(1, d).astype(jnp.float32)

    cost = pl.CostEstimate(
        flops=2 * n_pad * v * d + 7 * n_pad * d,
        transcendentals=n_pad,
        bytes_accessed=v * d * itemsize + 2 * n_pad * d * itemsize + n_pad * 4,
    )

    out = pl.pallas_call(
        functools.partial(_emb_ln_resident_kernel, vocab=v),
        out_shape=jax.ShapeDtypeStruct((n_pad, d), table.dtype),
        grid_spec=pltpu.PrefetchScalarGridSpec(
            num_scalar_prefetch=0,
            grid=(num_tiles,),
            in_specs=[
                pl.BlockSpec((tm, 1), lambda t: (t, 0)),   # ids tile
                pl.BlockSpec((v, d), lambda t: (0, 0)),    # full table, resident
                pl.BlockSpec((1, d), lambda t: (0, 0)),    # gamma
                pl.BlockSpec((1, d), lambda t: (0, 0)),    # beta
            ],
            out_specs=pl.BlockSpec((tm, d), lambda t: (t, 0)),
        ),
        compiler_params=pltpu.CompilerParams(
            dimension_semantics=("parallel",),             # tokens independent
            vmem_limit_bytes=int(min(vmem_cap // 2, 64 * 1024 * 1024)),
        ),
        cost_estimate=cost,
    )(ids_col, table, gamma2, beta2)

    return out if n_pad == n else out[:n]


# ---------------------------------------------------------------------------
# Path B (large vocab): batched manual-DMA row gather (P4 double buffer).
#   ids in SMEM (scalar prefetch), table stays in HBM, TM rows gathered per
#   grid step into a (2, TM, D) VMEM scratch; next tile's gather overlaps the
#   current tile's LayerNorm + output writeback.
# ---------------------------------------------------------------------------
def _emb_ln_gather_kernel(ids_ref, table_hbm, gamma_ref, beta_ref, o_ref,
                          buf, sem, *, tm, vocab):
    i = pl.program_id(0)
    nt = pl.num_programs(0)
    n_ids = ids_ref.shape[0]
    slot = lax.rem(i, 2)

    def issue_gather(tile, slot_):
        base = tile * tm

        @pl.loop(0, tm)
        def _(t):
            tok = jnp.minimum(base + t, n_ids - 1)            # stay inside SMEM ids
            row = jnp.clip(ids_ref[tok], 0, vocab - 1)        # stay inside the table
            pltpu.make_async_copy(
                table_hbm.at[pl.ds(row, 1), :],
                buf.at[slot_, pl.ds(t, 1), :],
                sem.at[slot_]).start()

    def wait_gather(slot_):
        @pl.loop(0, tm)
        def _(t):
            # One wait per issued row copy, with an identically shaped descriptor.
            pltpu.make_async_copy(
                table_hbm.at[pl.ds(0, 1), :],
                buf.at[slot_, pl.ds(t, 1), :],
                sem.at[slot_]).wait()

    @pl.when(i == 0)
    def _():
        issue_gather(0, 0)            # prime the first tile

    @pl.when(i + 1 < nt)
    def _():
        issue_gather(i + 1, 1 - slot)  # prefetch next tile into the other slot

    wait_gather(slot)

    x = buf[slot].astype(jnp.float32)  # (TM, D)
    o_ref[...] = _layer_norm_f32(x, gamma_ref[...], beta_ref[...]).astype(o_ref.dtype)


def _embeddings_row_gather(ids_flat, table, gamma, beta, *, vmem_cap,
                           tokens_per_tile=256):
    n = ids_flat.shape[0]
    v, d = table.shape
    itemsize = jnp.dtype(table.dtype).itemsize
    d_pad = _round_up(d, 128)

    # Cap TM so the two gather slots + pipelined output + f32 temps stay small.
    per_tok = 2 * d_pad * itemsize + 5 * d_pad * 4
    tm = max(8, min(tokens_per_tile, (4 * 1024 * 1024) // max(per_tok, 1)) // 8 * 8)

    n_pad = _round_up(n, 8)
    tm = min(tm, n_pad)
    num_tiles = pl.cdiv(n_pad, tm)

    ids_pad = jnp.pad(ids_flat, (0, n_pad - n))
    gamma2 = gamma.reshape(1, d).astype(jnp.float32)
    beta2 = beta.reshape(1, d).astype(jnp.float32)

    out = pl.pallas_call(
        functools.partial(_emb_ln_gather_kernel, tm=tm, vocab=v),
        out_shape=jax.ShapeDtypeStruct((n_pad, d), table.dtype),
        grid_spec=pltpu.PrefetchScalarGridSpec(
            num_scalar_prefetch=1,                           # ids -> SMEM
            grid=(num_tiles,),
            in_specs=[
                pl.BlockSpec(memory_space=pl.ANY),           # table stays in HBM
                pl.BlockSpec((1, d), lambda i, ids: (0, 0)),  # gamma
                pl.BlockSpec((1, d), lambda i, ids: (0, 0)),  # beta
            ],
            out_specs=pl.BlockSpec((tm, d), lambda i, ids: (i, 0)),
            scratch_shapes=[
                pltpu.VMEM((2, tm, d), table.dtype),         # double-buffered gather
                pltpu.SemaphoreType.DMA((2,)),
            ],
        ),
        compiler_params=pltpu.CompilerParams(
            # Cross-step manual double-buffering carries state between grid
            # steps -> the token axis must run sequentially on one core.
            dimension_semantics=("arbitrary",),
            vmem_limit_bytes=int(min(vmem_cap // 2, 64 * 1024 * 1024)),
        ),
    )(ids_pad, table, gamma2, beta2)

    return out if n_pad == n else out[:n]


# ---------------------------------------------------------------------------
# Public wrapper == Embeddings_no_position.forward (eval mode)
# ---------------------------------------------------------------------------
def embeddings_no_position(input_dp, table, gamma, beta):
    """input_dp: (B, S) int token ids; table: (V, D); gamma/beta: (D,)."""
    b, s = input_dp.shape
    v, d = table.shape
    # Clamp ids so a bad id can never address outside the table.
    ids = jnp.clip(input_dp.reshape(-1).astype(jnp.int32), 0, v - 1)

    itemsize = jnp.dtype(table.dtype).itemsize
    cap = _vmem_capacity_bytes()
    # Resident one-hot path only for small vocabularies: the (TM, V) one-hot
    # intermediate scales with V, and the (double-buffered) resident table
    # must stay a small fraction of per-core VMEM (v7x: 64 MiB).
    table_resident_bytes = 2 * _round_up(v, 8) * _round_up(d, 128) * itemsize
    if v <= _ONEHOT_MAX_VOCAB and table_resident_bytes <= cap // 8:
        out_flat = _embeddings_resident(ids, table, gamma, beta, vmem_cap=cap)
    else:
        out_flat = _embeddings_row_gather(ids, table, gamma, beta, vmem_cap=cap)
    return out_flat.reshape(b, s, d)


if __name__ == "__main__":
    key = jax.random.PRNGKey(0)
    B, S = 2, 8          # batch, sequence length
    V, D = 50, 32        # vocab_size, emb_size

    k_ids, k_tab = jax.random.split(key)
    input_dp = jax.random.randint(k_ids, (B, S), 0, V, dtype=jnp.int32)
    # deterministic synthetic parameters (no checkpoint):
    table = jax.random.normal(k_tab, (V, D), dtype=jnp.float32)  # word_embeddings.weight
    gamma = jnp.ones((D,), jnp.float32)                          # LayerNorm.gamma
    beta = jnp.zeros((D,), jnp.float32)                          # LayerNorm.beta

    out = embeddings_no_position(input_dp, table, gamma, beta)
    out = jax.block_until_ready(out)

    # pure-JAX reference for sanity
    ref = table[input_dp]
    u = ref.mean(-1, keepdims=True)
    sv = ((ref - u) ** 2).mean(-1, keepdims=True)
    ref = gamma * ((ref - u) / jnp.sqrt(sv + EPS)) + beta
    assert out.shape == (B, S, D)
    assert jnp.allclose(out, ref, atol=1e-5), "mismatch vs reference"

    print("KERNEL_OK")
</pallas_src>

<mosaic_0001>
module attributes {stable_mosaic.version = 11 : i64} {
  func.func @_emb_ln_resident_kernel(%arg0: i32, %arg1: memref<8x1xi32, #tpu.memory_space<vmem>>, %arg2: memref<50x32xf32, #tpu.memory_space<vmem>>, %arg3: memref<1x32xf32, #tpu.memory_space<vmem>>, %arg4: memref<1x32xf32, #tpu.memory_space<vmem>>, %arg5: memref<8x32xf32, #tpu.memory_space<vmem>>) attributes {dimension_semantics = [#tpu.dimension_semantics<parallel>], iteration_bounds = array<i64: 2>, scalar_prefetch = 0 : i64, scratch_operands = 0 : i64, tpu.core_type = #tpu.core_type<tc>, window_params = [{transform_indices = @transform_0, window_bounds = array<i64: 8, 1>}, {pipeline_mode = #tpu.pipeline_mode<synchronous>, transform_indices = @transform_1, window_bounds = array<i64: 50, 32>}, {pipeline_mode = #tpu.pipeline_mode<synchronous>, transform_indices = @transform_2, window_bounds = array<i64: 1, 32>}, {pipeline_mode = #tpu.pipeline_mode<synchronous>, transform_indices = @transform_3, window_bounds = array<i64: 1, 32>}, {transform_indices = @transform_4, window_bounds = array<i64: 8, 32>}]} {
    %c0 = arith.constant 0 : index
    %c0_0 = arith.constant 0 : index
    %0 = vector.load %arg1[%c0, %c0_0] : memref<8x1xi32, #tpu.memory_space<vmem>>, vector<8x1xi32>
    %c0_1 = arith.constant 0 : index
    %c0_2 = arith.constant 0 : index
    %1 = vector.load %arg2[%c0_1, %c0_2] : memref<50x32xf32, #tpu.memory_space<vmem>>, vector<50x32xf32>
    %2 = tpu.iota {dimensions = array<i32: 1>} : vector<8x50xi32>
    %3 = vector.broadcast %0 : vector<8x1xi32> to vector<8x50xi32>
    %4 = arith.cmpi eq, %2, %3 : vector<8x50xi32>
    %5 = arith.extui %4 : vector<8x50xi1> to vector<8x50xi32>
    %6 = arith.sitofp %5 : vector<8x50xi32> to vector<8x50xf32>
    %cst = arith.constant dense<0.000000e+00> : vector<8x32xf32>
    %7 = tpu.matmul %6, %1, %cst {dimension_numbers = #tpu.dot_dimension_numbers<[1], [0], [0], [1], [0, 0, 1, 1], [], []>} : vector<8x50xf32>, vector<50x32xf32>, vector<8x32xf32> -> vector<8x32xf32>
    %c0_3 = arith.constant 0 : index
    %c0_4 = arith.constant 0 : index
    %8 = vector.load %arg3[%c0_3, %c0_4] : memref<1x32xf32, #tpu.memory_space<vmem>>, vector<1x32xf32>
    %c0_5 = arith.constant 0 : index
    %c0_6 = arith.constant 0 : index
    %9 = vector.load %arg4[%c0_5, %c0_6] : memref<1x32xf32, #tpu.memory_space<vmem>>, vector<1x32xf32>
    %cst_7 = arith.constant dense<0.000000e+00> : vector<8xf32>
    %10 = vector.multi_reduction <add>, %7, %cst_7 [1] : vector<8x32xf32> to vector<8xf32>
    %11 = vector.shape_cast %10 : vector<8xf32> to vector<8x1xf32>
    %cst_8 = arith.constant 3.200000e+01 : f32
    %12 = vector.broadcast %cst_8 : f32 to vector<8x1xf32>
    %13 = arith.divf %11, %12 : vector<8x1xf32>
    %14 = vector.broadcast %13 : vector<8x1xf32> to vector<8x32xf32>
    %15 = arith.subf %7, %14 : vector<8x32xf32>
    %16 = arith.mulf %15, %15 : vector<8x32xf32>
    %cst_9 = arith.constant dense<0.000000e+00> : vector<8xf32>
    %17 = vector.multi_reduction <add>, %16, %cst_9 [1] : vector<8x32xf32> to vector<8xf32>
    %18 = vector.shape_cast %17 : vector<8xf32> to vector<8x1xf32>
    %cst_10 = arith.constant 3.200000e+01 : f32
    %19 = vector.broadcast %cst_10 : f32 to vector<8x1xf32>
    %20 = arith.divf %18, %19 : vector<8x1xf32>
    %cst_11 = arith.constant 9.99999996E-13 : f32
    %21 = vector.broadcast %cst_11 : f32 to vector<8x1xf32>
    %22 = arith.addf %20, %21 : vector<8x1xf32>
    %23 = math.rsqrt %22 : vector<8x1xf32>
    %24 = vector.broadcast %23 : vector<8x1xf32> to vector<8x32xf32>
    %25 = arith.mulf %15, %24 : vector<8x32xf32>
    %26 = vector.broadcast %8 : vector<1x32xf32> to vector<8x32xf32>
    %27 = arith.mulf %26, %25 : vector<8x32xf32>
    %28 = vector.broadcast %9 : vector<1x32xf32> to vector<8x32xf32>
    %29 = arith.addf %27, %28 : vector<8x32xf32>
    %c0_12 = arith.constant 0 : index
    %c0_13 = arith.constant 0 : index
    %30 = vector.load %arg5[%c0_12, %c0_13] : memref<8x32xf32, #tpu.memory_space<vmem>>, vector<8x32xf32>
    tpu.vector_store %arg5[%c0_12, %c0_13], %29 {strides = array<i32>} : memref<8x32xf32, #tpu.memory_space<vmem>>, vector<8x32xf32>,
    return
  }
  func.func @transform_0(%arg0: i32) -> (i32, i32) {
    %c0_i32 = arith.constant 0 : i32
    %c0_i32_0 = arith.constant 0 : i32
    return %arg0, %c0_i32 : i32, i32
  }
  func.func @transform_1(%arg0: i32) -> (i32, i32) {
    %c0_i32 = arith.constant 0 : i32
    %c0_i32_0 = arith.constant 0 : i32
    %c0_i32_1 = arith.constant 0 : i32
    return %c0_i32, %c0_i32_0 : i32, i32
  }
  func.func @transform_2(%arg0: i32) -> (i32, i32) {
    %c0_i32 = arith.constant 0 : i32
    %c0_i32_0 = arith.constant 0 : i32
    %c0_i32_1 = arith.constant 0 : i32
    return %c0_i32, %c0_i32_0 : i32, i32
  }
  func.func @transform_3(%arg0: i32) -> (i32, i32) {
    %c0_i32 = arith.constant 0 : i32
    %c0_i32_0 = arith.constant 0 : i32
    %c0_i32_1 = arith.constant 0 : i32
    return %c0_i32, %c0_i32_0 : i32, i32
  }
  func.func @transform_4(%arg0: i32) -> (i32, i32) {
    %c0_i32 = arith.constant 0 : i32
    %c0_i32_0 = arith.constant 0 : i32
    return %arg0, %c0_i32 : i32, i32
  }
}

</mosaic_0001>

<llo_original>
// kernel: tpu_custom_call.1
$region0: #{tpu_custom_call.1}
  #allocation0 [shape = 'u32[]', space=smem, size = 0x4, offset = 0x4, fixed_abs, tag = 'smem constant byte address 0x4 - core index']
  #allocation1 [shape = 'u32[144,128]{1,0:T(1,128)}', space=vmem, size = 0x12000, scoped, tag = 'internal scratch']
  %s0 = inlined_call_operand.vmem [shape: s32[16,1], index: 0, kind: input, shape index: {}]
  %s1 = inlined_call_operand.vmem [shape: f32[50,32], index: 1, kind: input, shape index: {}]
  %s2 = inlined_call_operand.vmem [shape: f32[1,32], index: 2, kind: input, shape index: {}]
  %s3 = inlined_call_operand.vmem [shape: f32[1,32], index: 3, kind: input, shape index: {}]
  %s4 = inlined_call_operand.hbm [shape: f32[16,32], index: 4, kind: output, shape index: {}]
  %s5 = sld [smem:[#allocation0]]
  $region49: #{tpu_custom_call.1} parent=0
    _
  %s7 = ssub.s32 1, %s5
  %s8 = scalar_select 0, %s7, %s5
  $region1: #{tpu_custom_call.1} parent=0
    #allocation2 [shape = 'u8[8192]{0}', space=vmem, size = 0x2000, scoped, tag = 'output window, operand 0']
    #allocation3 [shape = 's32[2]{0}', space=sflag, size = 0x8, scoped, tag = 'scoped memory for tpu_custom_call.1']
    %9 = vsyncpa [#allocation3], 0
    %s10 = scalar_lea.sflag [#allocation3], 1
    %11 = vsyncpa %s10, 0
    loop: start=0, step=1, limit=4
    $region2: #{tpu_custom_call.1} parent=1 // loop_pre_header
      _
    $region3: #{tpu_custom_call.1} parent=1 // loop_header
      %s13 = sphi 0, %s17
      %p14 = scmp.ge.s32.totalorder %s13, 4
      %s23 = sphi 0, %s25
      %s26 = sphi 0, %s23
      %s27 = sphi 0, %s26
      %s43 = sphi 0, %s27
      %s47 = sphi 0, %s47
      %s49 = sphi 0, %s47
      %s50 = sphi 0, %s49
      %s64 = sphi 0, %s50
      %s68 = sphi 0, %s68
      %s70 = sphi 0, %s68
      %s71 = sphi 0, %s70
      %s85 = sphi 0, %s71
      %s89 = sphi 0, %s89
      %s91 = sphi 0, %s89
      %s92 = sphi 0, %s91
      %s106 = sphi 0, %s92
      %s112 = sphi 0, %s114
      %s115 = sphi 0, %s112
      %s116 = sphi 0, %s115
      %s132 = sphi 0, %s116
    $region4: #{tpu_custom_call.1} parent=1 // loop_header_branch
      %16 = sbr.rel (%p14) target = $region8
    $region5: #{tpu_custom_call.1} parent=1 // loop_body
      %s18 = ssub.s32 %s13, 1
      %s19 = ssub.s32 %s13, 2
      %s20 = sadd.s32 %s13, 1
      %s21 = ssub.s32 %s13, %s20
      %p22 = scmp.eq.s32.totalorder %s21, 0
      %s24 = sadd.s32 %s23, 1
      %s25 = scalar_select %p22, %s23, %s24
      %p28 = pneg %p22
      %p29 = scmp.eq.s32.totalorder %s13, 1
      %p30 = por %p28, %p29
      %p31 = scmp.ne.s32.totalorder %s23, %s26
      %p32 = scmp.eq.s32.totalorder %s13, 0
      %p33 = por %p31, %p32
      %p34 = scmp.ne.s32.totalorder %s23, %s26
      %p35 = scmp.eq.s32.totalorder %s18, 1
      %p36 = por %p34, %p35
      %p37 = scmp.ne.s32.totalorder %s26, %s27
      %p38 = scmp.eq.s32.totalorder %s18, 0
      %p39 = por %p37, %p38
      %p40 = scmp.ne.s32.totalorder %s26, %s27
      %p41 = scmp.eq.s32.totalorder %s19, 1
      %p42 = por %p40, %p41
      %p44 = scmp.ne.s32.totalorder %s27, %s43
      %p45 = scmp.eq.s32.totalorder %s19, 0
      %p46 = por %p44, %p45
      %s48 = sadd.s32 %s47, 1
      %p51 = scmp.eq.s32.totalorder %s13, 1
      %p52 = scmp.ne.s32.totalorder %s47, %s49
      %p53 = scmp.eq.s32.totalorder %s13, 0
      %p54 = por %p52, %p53
      %p55 = scmp.ne.s32.totalorder %s47, %s49
      %p56 = scmp.eq.s32.totalorder %s18, 1
      %p57 = por %p55, %p56
      %p58 = scmp.ne.s32.totalorder %s49, %s50
      %p59 = scmp.eq.s32.totalorder %s18, 0
      %p60 = por %p58, %p59
      %p61 = scmp.ne.s32.totalorder %s49, %s50
      %p62 = scmp.eq.s32.totalorder %s19, 1
      %p63 = por %p61, %p62
      %p65 = scmp.ne.s32.totalorder %s50, %s64
      %p66 = scmp.eq.s32.totalorder %s19, 0
      %p67 = por %p65, %p66
      %s69 = sadd.s32 %s68, 1
      %p72 = scmp.eq.s32.totalorder %s13, 1
      %p73 = scmp.ne.s32.totalorder %s68, %s70
      %p74 = scmp.eq.s32.totalorder %s13, 0
      %p75 = por %p73, %p74
      %p76 = scmp.ne.s32.totalorder %s68, %s70
      %p77 = scmp.eq.s32.totalorder %s18, 1
      %p78 = por %p76, %p77
      %p79 = scmp.ne.s32.totalorder %s70, %s71
      %p80 = scmp.eq.s32.totalorder %s18, 0
      %p81 = por %p79, %p80
      %p82 = scmp.ne.s32.totalorder %s70, %s71
      %p83 = scmp.eq.s32.totalorder %s19, 1
      %p84 = por %p82, %p83
      %p86 = scmp.ne.s32.totalorder %s71, %s85
      %p87 = scmp.eq.s32.totalorder %s19, 0
      %p88 = por %p86, %p87
      %s90 = sadd.s32 %s89, 1
      %p93 = scmp.eq.s32.totalorder %s13, 1
      %p94 = scmp.ne.s32.totalorder %s89, %s91
      %p95 = scmp.eq.s32.totalorder %s13, 0
      %p96 = por %p94, %p95
      %p97 = scmp.ne.s32.totalorder %s89, %s91
      %p98 = scmp.eq.s32.totalorder %s18, 1
      %p99 = por %p97, %p98
      %p100 = scmp.ne.s32.totalorder %s91, %s92
      %p101 = scmp.eq.s32.totalorder %s18, 0
      %p102 = por %p100, %p101
      %p103 = scmp.ne.s32.totalorder %s91, %s92
      %p104 = scmp.eq.s32.totalorder %s19, 1
      %p105 = por %p103, %p104
      %p107 = scmp.ne.s32.totalorder %s92, %s106
      %p108 = scmp.eq.s32.totalorder %s19, 0
      %p109 = por %p107, %p108
      %s110 = ssub.s32 %s13, %s20
      %p111 = scmp.eq.s32.totalorder %s110, 0
      %s113 = sadd.s32 %s112, 1
      %s114 = scalar_select %p111, %s112, %s113
      %p117 = pneg %p111
      %p118 = scmp.eq.s32.totalorder %s13, 1
      %p119 = por %p117, %p118
      %p120 = scmp.ne.s32.totalorder %s112, %s115
      %p121 = scmp.eq.s32.totalorder %s13, 0
      %p122 = por %p120, %p121
      %p123 = scmp.ne.s32.totalorder %s112, %s115
      %p124 = scmp.eq.s32.totalorder %s18, 1
      %p125 = por %p123, %p124
      %p126 = scmp.ne.s32.totalorder %s115, %s116
      %p127 = scmp.eq.s32.totalorder %s18, 0
      %p128 = por %p126, %p127
      %p129 = scmp.ne.s32.totalorder %s115, %s116
      %p130 = scmp.eq.s32.totalorder %s19, 1
      %p131 = por %p129, %p130
      %p133 = scmp.ne.s32.totalorder %s116, %s132
      %p134 = scmp.eq.s32.totalorder %s19, 0
      %p135 = por %p133, %p134
      %p136 = scmp.le.s32.totalorder 1, %s13
      %p137 = scmp.lt.s32.totalorder %s13, 3
      %p138 = pnand %p136, %p137
      %p139 = pneg %p138
      // Predicated region
      $region9: #{tpu_custom_call.1} parent=5 // pred_check
        _
      $region10: #{tpu_custom_call.1} parent=5 // pred_check_branch
        %141 = sbr.rel (%p138) target = $region12
      $region11: #{tpu_custom_call.1} parent=5 // pred_region
        %s142 = ssub.s32 %s13, 1
        // Predicated region
        $region13: #{tpu_custom_call.1} parent=11 // pred_check
          %p143 = pneg %p60
        $region14: #{tpu_custom_call.1} parent=11 // pred_check_branch
          %145 = sbr.rel (%p143) target = $region16
        $region15: #{tpu_custom_call.1} parent=11 // pred_region
          _
        $region16: #{tpu_custom_call.1} parent=11 // pred_fallthru
          _
        // Predicated region
        $region17: #{tpu_custom_call.1} parent=11 // pred_check
          %p146 = pneg %p81
        $region18: #{tpu_custom_call.1} parent=11 // pred_check_branch
          %148 = sbr.rel (%p146) target = $region20
        $region19: #{tpu_custom_call.1} parent=11 // pred_region
          _
        $region20: #{tpu_custom_call.1} parent=11 // pred_fallthru
          _
        // Predicated region
        $region21: #{tpu_custom_call.1} parent=11 // pred_check
          %p149 = pneg %p102
        $region22: #{tpu_custom_call.1} parent=11 // pred_check_branch
          %151 = sbr.rel (%p149) target = $region24
        $region23: #{tpu_custom_call.1} parent=11 // pred_region
          _
        $region24: #{tpu_custom_call.1} parent=11 // pred_fallthru
          _
      $region12: #{tpu_custom_call.1} parent=5 // pred_fallthru
        _
      %p152 = scmp.lt.s32.totalorder %s13, 2
      // Predicated region
      $region25: #{tpu_custom_call.1} parent=5 // pred_check
        %p153 = pneg %p152
      $region26: #{tpu_custom_call.1} parent=5 // pred_check_branch
        %155 = sbr.rel (%p153) target = $region28
      $region27: #{tpu_custom_call.1} parent=5 // pred_region
        // Predicated region
        $region29: #{tpu_custom_call.1} parent=27 // pred_check
          %p156 = pneg %p33
        $region30: #{tpu_custom_call.1} parent=27 // pred_check_branch
          %158 = sbr.rel (%p156) target = $region32
        $region31: #{tpu_custom_call.1} parent=27 // pred_region
          %p159 = scmp.lt.s32.totalorder %s13, 1
          %s160 = scalar_select %p159, %s13, 1
          %s161 = smul.addr %s160, 8
          %s162 = scalar_lea.vmem %s0, %s161
        $region32: #{tpu_custom_call.1} parent=27 // pred_fallthru
          _
      $region28: #{tpu_custom_call.1} parent=5 // pred_fallthru
        _
      %p163 = scmp.le.s32.totalorder 1, %s13
      %p164 = scmp.lt.s32.totalorder %s13, 3
      %p165 = pnand %p163, %p164
      %p166 = pneg %p165
      // Predicated region
      $region33: #{tpu_custom_call.1} parent=5 // pred_check
        _
      $region34: #{tpu_custom_call.1} parent=5 // pred_check_branch
        %168 = sbr.rel (%p165) target = $region36
      $region35: #{tpu_custom_call.1} parent=5 // pred_region
        %s169 = ssub.s32 %s13, 1
        %p170 = scmp.lt.s32.totalorder %s18, 1
        %s171 = scalar_select %p170, %s18, 1
        %s172 = smul.addr %s171, 8
        %s173 = scalar_lea.vmem %s0, %s172
        %p174 = pneg %p39
        %p175 = pneg %p36
        %p176 = pneg %p60
        %p177 = pneg %p57
        %p178 = pneg %p81
        %p179 = pneg %p78
        %p180 = pneg %p102
        %p181 = pneg %p99
        %p182 = pneg %p128
        %p183 = pneg %p125
        %s184 = sand.u32 %s115, 1
        %s185 = scalar_lea.sflag [#allocation3], %s184
        %s186 = sand.u32 %s115, 1
        %s187 = smul.addr %s186, 8
        %s188 = scalar_lea.vmem [#allocation2], %s187
        %p189 = scmp.lt.s32.totalorder %s18, 1
        %s190 = scalar_select %p189, %s18, 1
        %s191 = smul.addr %s190, 8
        %s192 = scalar_lea.vmem %s0, %s191
        %v193 = vld [vmem:[%s192] sm:$0xff]
        %v194 = vld [vmem:[%s1] sm:$0xff]
        %v195 = vld [vmem:[%s1 + $0x8] sm:$0xff]
        %v196 = vld [vmem:[%s1 + $0x10] sm:$0xff]
        %v197 = vld [vmem:[%s1 + $0x18] sm:$0xff]
        %v198 = vld [vmem:[%s1 + $0x20] sm:$0xff]
        %v199 = vld [vmem:[%s1 + $0x28] sm:$0xff]
        %v200 = vld [vmem:[%s1 + $0x30] sm:$0x3]
        %v201 = vlaneseq
        %v202 = vand.u32 %v201, 127
        %203 = vset.pattern.permute.xlu0 0
        %204 = vperm.xlu0 %203, %v193
        %v205 = vpop.permute.xlu0 %204
        %vm206 = vcmp.eq.s32.totalorder %v202, %v205
        %v207 = vsel %vm206, 1, 0
        %v208 = vcvt.s32.f32 %v207
        %vm209 = vcmask 408576
        %v211 = vsel %vm209, %v208, 0
        %vm213 = vcmask 1041408
        %v215 = vsel %vm213, %v200, 0
        %217 = vmatprep.subr.mxu0 0.0
        %218 = vmatpush1.msra.mxu0 %v194
        %219 = vmatprep.subr.mxu0 0.0
        %220 = vmatpush1.msra.mxu0 %v195
        %221 = vmatprep.subr.mxu0 0.0
        %222 = vmatpush1.msra.mxu0 %v196
        %223 = vmatprep.subr.mxu0 0.0
        %224 = vmatpush1.msra.mxu0 %v197
        %225 = vmatprep.subr.mxu0 0.0
        %226 = vmatpush1.msra.mxu0 %v198
        %227 = vmatprep.subr.mxu0 0.0
        %228 = vmatpush1.msra.mxu0 %v199
        %229 = vmatprep.subr.mxu0 0.0
        %230 = vmatpush1.msra.mxu0 %v215
        %231 = vmatprep.subr.mxu0 0.0
        %232 = vmatpush1.msra.mxu0 0.0
        %233 = vmatprep.subr.mxu0 0.0
        %234 = vmatpush1.msra.mxu0 0.0
        %235 = vmatprep.subr.mxu0 0.0
        %236 = vmatpush1.msra.mxu0 0.0
        %237 = vmatprep.subr.mxu0 0.0
        %238 = vmatpush1.msra.mxu0 0.0
        %239 = vmatprep.subr.mxu0 0.0
        %240 = vmatpush1.msra.mxu0 0.0
        %241 = vmatprep.subr.mxu0 0.0
        %242 = vmatpush1.msra.mxu0 0.0
        %243 = vmatprep.subr.mxu0 0.0
        %244 = vmatpush1.msra.mxu0 0.0
        %245 = vmatprep.subr.mxu0 0.0
        %246 = vmatpush1.msra.mxu0 0.0
        %247 = vmatprep.subr.mxu0 0.0
        %248 = vmatpush1.msra.mxu0 0.0
        %249 = vmatprep.subr.mxu0 0.0
        %250 = vmatpush1.msra.mxu0 0.0
        %251 = vmatprep.subr.mxu0 0.0
        %252 = vmatpush1.msra.mxu0 0.0
        %253 = vmatprep.subr.mxu0 0.0
        %254 = vmatpush1.msra.mxu0 0.0
        %255 = vmatprep.subr.mxu0 0.0
        %256 = vmatpush1.msra.mxu0 0.0
        %257 = vmatprep.subr.mxu0 0.0
        %258 = vmatpush1.msra.mxu0 0.0
        %259 = vmatprep.subr.mxu0 0.0
        %260 = vmatpush1.msra.mxu0 0.0
        %261 = vmatprep.subr.mxu0 0.0
        %262 = vmatpush1.msra.mxu0 0.0
        %263 = vmatprep.subr.mxu0 0.0
        %264 = vmatpush1.msra.mxu0 0.0
        %265 = vmatprep.subr.mxu0 0.0
        %266 = vmatpush1.msra.mxu0 0.0
        %267 = vmatprep.subr.mxu0 0.0
        %268 = vmatpush1.msra.mxu0 0.0
        %269 = vmatprep.subr.mxu0 0.0
        %270 = vmatpush1.msra.mxu0 0.0
        %271 = vmatprep.subr.mxu0 0.0
        %272 = vmatpush1.msra.mxu0 0.0
        %273 = vmatprep.subr.mxu0 0.0
        %274 = vmatpush1.msra.mxu0 0.0
        %275 = vmatprep.subr.mxu0 0.0
        %276 = vmatpush1.msra.mxu0 0.0
        %277 = vmatprep.subr.mxu0 0.0
        %278 = vmatpush1.msra.mxu0 0.0
        %279 = vmatprep.subr.mxu0 0.0
        %280 = vmatpush1.msra.mxu0 0.0
        %281 = vmatprep.mubr.f32.mxu0 0.0
        %282 = vmatmul.mubr.f32.gmra.mrb[0].mxu0 %v211
        %v283 = vpop.f32.mrb[0].mxu0
        %v284 = vadd.f32 0.0, %v283
        %v285 = vpop.f32.mrb[0].mxu0
        %286 = vdwg.mxu0
        %v287 = vld [vmem:[%s2] sm:$0x1]
        %v288 = vld [vmem:[%s3] sm:$0x1]
        %vm289 = vcmask 261120
        %v290 = vsel %vm289, %v284, 0.0
        %291 = vadd.xlane.f32.xlu0 %v290
        %v292 = vpop.xlane.xlu0 %291
        %v293 = vrcp.pop 32.0
        %v294 = vmul.f32 %v292, %v293
        %v295 = vsub.f32 %v284, %v294
        %v296 = vmul.f32 %v295, %v295
        %v297 = vsel %vm289, %v296, 0.0
        %298 = vadd.xlane.f32.xlu0 %v297
        %v299 = vpop.xlane.xlu0 %298
        %v300 = vmul.f32 %v299, %v293
        %v301 = vadd.f32 %v300, 1e-12
        %v302 = vrsqrt.pop %v301
        %v303 = vmul.f32 %v295, %v302
        %v305 = vlaneseq
        %v306 = vshrl.u32 %v305, 7
        %v307 = vsub.s32 0, %v306
        %v308 = vrot.slane %v287, %v307
        %v310 = vmul.f32 %v308, %v303
        %v312 = vlaneseq
        %v313 = vshrl.u32 %v312, 7
        %v314 = vsub.s32 0, %v313
        %v315 = vrot.slane %v288, %v314
        %v317 = vadd.f32 %v310, %v315
        %318 = vst.msk [vmem:[%s188] sm:$0xff] %vm289, %v317
        %s319 = sand.u32 %s115, 1
        %s320 = scalar_lea.sflag [#allocation3], %s319
        %s321 = sand.u32 %s115, 1
        %s322 = smul.addr %s321, 8
        %s323 = scalar_lea.vmem [#allocation2], %s322
        // Predicated region
        $region37: #{tpu_custom_call.1} parent=35 // pred_check
          %p324 = pneg %p125
        $region38: #{tpu_custom_call.1} parent=35 // pred_check_branch
          %326 = sbr.rel (%p324) target = $region40
        $region39: #{tpu_custom_call.1} parent=35 // pred_region
          %s328 = ssub.s32 128, 128
          %329 = vsyncadd %s320, %s328
          %s330 = smul.addr %s18, 128
          %s331 = scalar_lea.hbm %s4, %s330
          %s333 = sshll.u32 %s323, 4
          %s334 = int_to_ptr.vmem [resolvable:$true] %s333
          %336 = dma.vmem_to_hbm [thread:$0]  %s334, 128, %s331, %s320
        $region40: #{tpu_custom_call.1} parent=35 // pred_fallthru
          _
      $region36: #{tpu_custom_call.1} parent=5 // pred_fallthru
        _
      %p337 = scmp.le.s32.totalorder 2, %s13
      // Predicated region
      $region41: #{tpu_custom_call.1} parent=5 // pred_check
        %p338 = pneg %p337
      $region42: #{tpu_custom_call.1} parent=5 // pred_check_branch
        %340 = sbr.rel (%p338) target = $region44
      $region43: #{tpu_custom_call.1} parent=5 // pred_region
        %s341 = ssub.s32 %s13, 2
        // Predicated region
        $region45: #{tpu_custom_call.1} parent=43 // pred_check
          %p342 = pneg %p131
        $region46: #{tpu_custom_call.1} parent=43 // pred_check_branch
          %344 = sbr.rel (%p342) target = $region48
        $region47: #{tpu_custom_call.1} parent=43 // pred_region
          %s345 = sand.u32 %s116, 1
          %s346 = scalar_lea.sflag [#allocation3], %s345
          %s347 = sand.u32 %s116, 1
          %s348 = smul.addr %s347, 8
          %s349 = scalar_lea.vmem [#allocation2], %s348
          %350 = dma.done %s346, 128
        $region48: #{tpu_custom_call.1} parent=43 // pred_fallthru
          _
      $region44: #{tpu_custom_call.1} parent=5 // pred_fallthru
        _
    $region6: #{tpu_custom_call.1} parent=1 // loop_footer
      %s17 = sadd.s32 1, %s13
    $region7: #{tpu_custom_call.1} parent=1 // loop_footer_branch
      %12 = sbr.rel target = $region3
    $region8: #{tpu_custom_call.1} parent=1 // loop_exit
      _
    %351 = vsyncpa [#allocation3], 1
    %s352 = scalar_lea.sflag [#allocation3], 1
    %353 = vsyncpa %s352, 1

</llo_original>
